<compile_context>
chip_gen: v7x
topology: tpu7x:2x2x1
jax: 0.10.0
libtpu: 0.0.40
codegen_flags: <defaults>
</compile_context>

<pallas_src>
import functools

import jax
import jax.numpy as jnp
from jax import lax
from jax.experimental import pallas as pl
from jax.experimental.pallas import tpu as pltpu


# ----------------------------- Pallas kernel --------------------------------

def fused_cnn_kernel(emb_ref, convw_ref, wvec_ref, convb_ref,
                     projw_ref, projb_ref, out_ref, *, n_taps):
    """Conv branches + max-over-time + ReLU + projection for one batch tile.

    emb_ref:   (TB, L, E)          bf16   gathered embeddings (batch tile)
    convw_ref: (E, n_taps*GB)      bf16   tap-major, 128-lane-aligned conv weights
    wvec_ref:  (1, GB)             int32  per-lane window size of owning branch
    convb_ref: (1, GB)             f32    packed conv biases (0 on pad lanes)
    projw_ref: (GB, NPAD)          bf16   projection weights (0 on pad rows/cols)
    projb_ref: (1, NPAD)           f32    projection bias (lane padded)
    out_ref:   (TB, NPAD)          f32    logits (first ntags lanes valid)
    GB = n_branches * 128, NPAD = round_up(ntags, 128).
    """
    TB, L, E = emb_ref.shape
    BL = TB * L
    GB = wvec_ref.shape[-1]

    # All branches, all window taps in ONE lane-dense bf16 matmul (f32 acc).
    y = lax.dot_general(emb_ref[...], convw_ref[...],
                        dimension_numbers=(((2,), (0,)), ((), ())),
                        preferred_element_type=jnp.float32)   # (TB, L, n_taps*GB)
    y = y.reshape(BL, n_taps * GB)                            # time on sublanes

    # Tap re-alignment: one whole-slab sublane roll (XLU) per distinct shift.
    # Rows that wrap across a sequence/batch boundary (t >= L - w) are a subset
    # of the rows masked below (t >= L - W_b + 1), so nothing leaks into the max.
    # Taps w >= W_b of a branch have all-zero weight columns -> contribute 0.
    acc = y[:, :GB]                                           # tap w = 0
    for w in range(1, n_taps):
        acc = acc + pltpu.roll(y[:, w * GB:(w + 1) * GB], shift=BL - w, axis=0)
    acc = acc.reshape(TB, L, GB)

    # Per-branch valid-length mask: branch b valid for t < L - W_b + 1.
    t_ids = lax.broadcasted_iota(jnp.int32, (L, GB), 0)
    t_valid = t_ids < (L + 1 - wvec_ref[...])                 # (L, GB)
    acc = jnp.where(t_valid[None], acc, -jnp.inf)

    # Conv bias is time-invariant -> add after the max (saves L broadcast adds).
    h = jnp.max(acc, axis=1) + convb_ref[...]                 # (TB, GB) f32
    h = jnp.maximum(h, 0.0)
    # TODO(synk): Dropout(p=0.5) implemented as identity (PyTorch eval() semantics).

    out_ref[...] = (jnp.dot(h.astype(projw_ref.dtype), projw_ref[...],
                            preferred_element_type=jnp.float32)
                    + projb_ref[...])


# ------------------------------ packing (once) --------------------------------

def _round_up(x, m):
    return ((x + m - 1) // m) * m


def pack_params(params):
    """One-time parameter packing (hoisted out of the jitted per-call path)."""
    convs = params["convs"]
    window_sizes = tuple(int(cw.shape[0]) for cw, _ in convs)
    num_filters = tuple(int(cw.shape[2]) for cw, _ in convs)
    E = int(convs[0][0].shape[1])
    nb = len(convs)
    max_w = max(window_sizes)
    GB = nb * 128                                             # lane-aligned branch groups

    # Conv weights packed tap-major: column (w*GB + b*128 + f) = cw_b[w, :, f];
    # every (tap, branch) group starts at a 128-lane boundary.
    convw = jnp.zeros((E, max_w, nb, 128), jnp.float32)
    convb = jnp.zeros((1, GB), jnp.float32)
    wvec = jnp.zeros((1, GB), jnp.int32)
    for b, (cw, cb) in enumerate(convs):
        W, _, F = cw.shape
        convw = convw.at[:, :W, b, :F].set(cw.transpose(1, 0, 2))
        convb = convb.at[0, b * 128:b * 128 + F].set(cb[0])
        wvec = wvec.at[0, b * 128:(b + 1) * 128].set(W)
    convw = convw.reshape(E, max_w * GB).astype(jnp.bfloat16)

    ntags = int(params["proj_w"].shape[1])
    npad = _round_up(ntags, 128)                              # lane-dense output store
    projw = jnp.zeros((GB, npad), jnp.float32)
    off = 0
    for b, F in enumerate(num_filters):
        projw = projw.at[b * 128:b * 128 + F, :ntags].set(params["proj_w"][off:off + F])
        off += F
    projw = projw.astype(jnp.bfloat16)
    projb = jnp.pad(params["proj_b"], ((0, 0), (0, npad - ntags))).astype(jnp.float32)

    # Gather is exact in any dtype; bf16 table -> bf16 emb = MXU-native operand.
    table = params["embedding"].astype(jnp.bfloat16)

    packed = dict(table=table, convw=convw, wvec=wvec, convb=convb,
                  projw=projw, projb=projb)
    meta = dict(ntags=ntags, max_window=max_w)
    return packed, meta


# ------------------------------ JAX wrapper ----------------------------------

@functools.partial(jax.jit, static_argnames=("ntags", "max_window"))
def cnn_forward(words, table, convw, wvec, convb, projw, projb, *,
                ntags, max_window):
    B, L = words.shape
    # PyTorch Conv1d would raise if L < kernel_size; require the same here.
    assert L >= max_window, "sequence shorter than the largest conv window"
    E = table.shape[1]
    GB = wvec.shape[1]
    n_taps = convw.shape[1] // GB
    npad = projw.shape[1]

    TB = min(64, _round_up(B, 8))                             # batch tile (sublane aligned)
    BPAD = _round_up(B, TB)
    if BPAD != B:
        words = jnp.pad(words, ((0, BPAD - B), (0, 0)))

    # Embedding lookup as an XLA gather (exact, O(B*L*E); no one-hot blow-up,
    # the table never has to live in VMEM -> scales to real vocabularies).
    emb = jnp.take(table, words, axis=0)                      # (BPAD, L, E) bf16

    grid = (BPAD // TB,)
    kernel = functools.partial(fused_cnn_kernel, n_taps=n_taps)

    # VMEM budget: double-buffered blocks + f32 intermediates, clamped.
    resident = (convw.size * 2 + wvec.size * 4 + convb.size * 4
                + projw.size * 2 + projb.size * 4)
    per_block = TB * L * E * 2 + TB * npad * 4
    interm = TB * L * n_taps * GB * 4
    vmem_limit = int(min(48 * 1024 * 1024,
                         max(16 * 1024 * 1024,
                             2 * (resident + per_block) + 3 * interm)))

    flops = 2 * BPAD * L * E * (n_taps * GB) + 2 * BPAD * GB * npad
    bytes_accessed = int(emb.size * 2 + resident + BPAD * npad * 4)

    out = pl.pallas_call(
        kernel,
        out_shape=jax.ShapeDtypeStruct((BPAD, npad), jnp.float32),
        grid_spec=pltpu.PrefetchScalarGridSpec(
            num_scalar_prefetch=0,
            grid=grid,
            in_specs=[
                pl.BlockSpec((TB, L, E), lambda i: (i, 0, 0)),      # emb: batch-tiled
                pl.BlockSpec((E, n_taps * GB), lambda i: (0, 0)),   # weights: resident
                pl.BlockSpec((1, GB), lambda i: (0, 0)),
                pl.BlockSpec((1, GB), lambda i: (0, 0)),
                pl.BlockSpec((GB, npad), lambda i: (0, 0)),
                pl.BlockSpec((1, npad), lambda i: (0, 0)),
            ],
            out_specs=pl.BlockSpec((TB, npad), lambda i: (i, 0)),
        ),
        compiler_params=pltpu.CompilerParams(
            dimension_semantics=("parallel",),                      # megacore on v7x
            vmem_limit_bytes=vmem_limit,
        ),
        cost_estimate=pl.CostEstimate(
            flops=flops, transcendentals=0, bytes_accessed=bytes_accessed),
    )(emb, convw, wvec, convb, projw, projb)
    return out[:B, :ntags]


# Pure-JAX reference (independent f32 formulation of the PyTorch forward).
def cnn_forward_ref(words, params):
    emb = jnp.take(params["embedding"], words, axis=0)
    hs = []
    for (cw, cb) in params["convs"]:
        W = cw.shape[0]
        T = emb.shape[1] - W + 1
        conv = sum(
            jnp.einsum("ble,ef->blf", emb[:, i:i + T, :], cw[i]) for i in range(W)
        ) + cb[0]
        hs.append(conv.max(axis=1))
    h = jnp.maximum(jnp.concatenate(hs, axis=1), 0.0)
    return h @ params["proj_w"] + params["proj_b"][0]


# --------------------------------- main --------------------------------------

if __name__ == "__main__":
    # Small, deterministic configuration consistent with the module's __init__.
    nwords = 50
    emb_size = 32
    num_filters = [8, 8]
    window_size = [3, 4]
    ntags = 5
    batch = 2
    seq_len = 16

    key = jax.random.PRNGKey(0)
    k_emb, k_words, k_proj_w, k_proj_b, *k_convs = jax.random.split(
        key, 4 + 2 * len(num_filters))

    params = {
        "embedding": jax.random.normal(k_emb, (nwords, emb_size), jnp.float32) * 0.1,
        "convs": [],
        "proj_w": jax.random.normal(
            k_proj_w, (sum(num_filters), ntags), jnp.float32) * 0.1,
        "proj_b": jax.random.normal(k_proj_b, (1, ntags), jnp.float32) * 0.1,
    }
    for i, (nf, ws) in enumerate(zip(num_filters, window_size)):
        kw = k_convs[2 * i]
        kb = k_convs[2 * i + 1]
        cw = jax.random.normal(kw, (ws, emb_size, nf), jnp.float32) * 0.1
        cb = jax.random.normal(kb, (1, nf), jnp.float32) * 0.1
        params["convs"].append((cw, cb))

    words = jax.random.randint(k_words, (batch, seq_len), 0, nwords, jnp.int32)

    packed, meta = pack_params(params)                 # pack once (off the hot path)
    out = jax.block_until_ready(cnn_forward(words, **packed, **meta))
    ref = jax.block_until_ready(cnn_forward_ref(words, params))

    assert out.shape == (batch, ntags), out.shape
    # bf16 matmul operands (f32 accumulation) -> relaxed tolerance vs f32 reference.
    assert jnp.allclose(out, ref, atol=2e-2, rtol=2e-2), (out, ref)
    print("KERNEL_OK")
</pallas_src>

<mosaic_0001>
module attributes {stable_mosaic.version = 11 : i64} {
  func.func @fused_cnn_kernel(%arg0: i32, %arg1: memref<8x16x32xbf16, #tpu.memory_space<vmem>>, %arg2: memref<32x1024xbf16, #tpu.memory_space<vmem>>, %arg3: memref<1x256xi32, #tpu.memory_space<vmem>>, %arg4: memref<1x256xf32, #tpu.memory_space<vmem>>, %arg5: memref<256x128xbf16, #tpu.memory_space<vmem>>, %arg6: memref<1x128xf32, #tpu.memory_space<vmem>>, %arg7: memref<8x128xf32, #tpu.memory_space<vmem>>) attributes {dimension_semantics = [#tpu.dimension_semantics<parallel>], iteration_bounds = array<i64: 1>, scalar_prefetch = 0 : i64, scratch_operands = 0 : i64, tpu.core_type = #tpu.core_type<tc>, window_params = [{transform_indices = @transform_0, window_bounds = array<i64: 8, 16, 32>}, {pipeline_mode = #tpu.pipeline_mode<synchronous>, transform_indices = @transform_1, window_bounds = array<i64: 32, 1024>}, {pipeline_mode = #tpu.pipeline_mode<synchronous>, transform_indices = @transform_2, window_bounds = array<i64: 1, 256>}, {pipeline_mode = #tpu.pipeline_mode<synchronous>, transform_indices = @transform_3, window_bounds = array<i64: 1, 256>}, {pipeline_mode = #tpu.pipeline_mode<synchronous>, transform_indices = @transform_4, window_bounds = array<i64: 256, 128>}, {pipeline_mode = #tpu.pipeline_mode<synchronous>, transform_indices = @transform_5, window_bounds = array<i64: 1, 128>}, {transform_indices = @transform_6, window_bounds = array<i64: 8, 128>}]} {
    %c0 = arith.constant 0 : index
    %c0_0 = arith.constant 0 : index
    %c0_1 = arith.constant 0 : index
    %0 = vector.load %arg1[%c0, %c0_0, %c0_1] : memref<8x16x32xbf16, #tpu.memory_space<vmem>>, vector<8x16x32xbf16>
    %c0_2 = arith.constant 0 : index
    %c0_3 = arith.constant 0 : index
    %1 = vector.load %arg2[%c0_2, %c0_3] : memref<32x1024xbf16, #tpu.memory_space<vmem>>, vector<32x1024xbf16>
    %cst = arith.constant dense<0.000000e+00> : vector<8x16x1024xf32>
    %2 = tpu.matmul %0, %1, %cst {dimension_numbers = #tpu.dot_dimension_numbers<[2], [0], [0, 1], [1], [0, 0, 0, 1, 1, 1], [], []>} : vector<8x16x32xbf16>, vector<32x1024xbf16>, vector<8x16x1024xf32> -> vector<8x16x1024xf32>
    %3 = vector.shape_cast %2 : vector<8x16x1024xf32> to vector<128x1024xf32>
    %4 = vector.extract_strided_slice %3 {offsets = [0, 0], sizes = [128, 256], strides = [1, 1]} : vector<128x1024xf32> to vector<128x256xf32>
    %5 = vector.extract_strided_slice %3 {offsets = [0, 256], sizes = [128, 256], strides = [1, 1]} : vector<128x1024xf32> to vector<128x256xf32>
    %c127_i32 = arith.constant 127 : i32
    %6 = tpu.dynamic_rotate %5 by %c127_i32 dim 0 : vector<128x256xf32>, i32 -> vector<128x256xf32>
    %7 = arith.addf %4, %6 : vector<128x256xf32>
    %8 = vector.extract_strided_slice %3 {offsets = [0, 512], sizes = [128, 256], strides = [1, 1]} : vector<128x1024xf32> to vector<128x256xf32>
    %c126_i32 = arith.constant 126 : i32
    %9 = tpu.dynamic_rotate %8 by %c126_i32 dim 0 : vector<128x256xf32>, i32 -> vector<128x256xf32>
    %10 = arith.addf %7, %9 : vector<128x256xf32>
    %11 = vector.extract_strided_slice %3 {offsets = [0, 768], sizes = [128, 256], strides = [1, 1]} : vector<128x1024xf32> to vector<128x256xf32>
    %c125_i32 = arith.constant 125 : i32
    %12 = tpu.dynamic_rotate %11 by %c125_i32 dim 0 : vector<128x256xf32>, i32 -> vector<128x256xf32>
    %13 = arith.addf %10, %12 : vector<128x256xf32>
    %14 = vector.shape_cast %13 : vector<128x256xf32> to vector<8x16x256xf32>
    %15 = tpu.iota {dimensions = array<i32: 0>} : vector<16x256xi32>
    %c0_4 = arith.constant 0 : index
    %c0_5 = arith.constant 0 : index
    %16 = vector.load %arg3[%c0_4, %c0_5] : memref<1x256xi32, #tpu.memory_space<vmem>>, vector<1x256xi32>
    %c17_i32 = arith.constant 17 : i32
    %17 = vector.broadcast %c17_i32 : i32 to vector<1x256xi32>
    %18 = arith.subi %17, %16 : vector<1x256xi32>
    %19 = vector.broadcast %18 : vector<1x256xi32> to vector<16x256xi32>
    %20 = arith.cmpi slt, %15, %19 : vector<16x256xi32>
    %21 = vector.shape_cast %20 : vector<16x256xi1> to vector<1x16x256xi1>
    %cst_6 = arith.constant 0xFF800000 : f32
    %22 = vector.shape_cast %21 : vector<1x16x256xi1> to vector<1x16x256xi1>
    %23 = vector.broadcast %22 : vector<1x16x256xi1> to vector<8x16x256xi1>
    %24 = vector.broadcast %cst_6 : f32 to vector<8x16x256xf32>
    %25 = arith.select %23, %14, %24 : vector<8x16x256xi1>, vector<8x16x256xf32>
    %cst_7 = arith.constant dense<0xFF800000> : vector<8x256xf32>
    %26 = vector.multi_reduction <maximumf>, %25, %cst_7 [1] : vector<8x16x256xf32> to vector<8x256xf32>
    %c0_8 = arith.constant 0 : index
    %c0_9 = arith.constant 0 : index
    %27 = vector.load %arg4[%c0_8, %c0_9] : memref<1x256xf32, #tpu.memory_space<vmem>>, vector<1x256xf32>
    %28 = vector.broadcast %27 : vector<1x256xf32> to vector<8x256xf32>
    %29 = arith.addf %26, %28 : vector<8x256xf32>
    %cst_10 = arith.constant 0.000000e+00 : f32
    %30 = vector.broadcast %cst_10 : f32 to vector<8x256xf32>
    %31 = arith.maximumf %29, %30 : vector<8x256xf32>
    %32 = arith.truncf %31 : vector<8x256xf32> to vector<8x256xbf16>
    %c0_11 = arith.constant 0 : index
    %c0_12 = arith.constant 0 : index
    %33 = vector.load %arg5[%c0_11, %c0_12] : memref<256x128xbf16, #tpu.memory_space<vmem>>, vector<256x128xbf16>
    %cst_13 = arith.constant dense<0.000000e+00> : vector<8x128xf32>
    %34 = tpu.matmul %32, %33, %cst_13 {dimension_numbers = #tpu.dot_dimension_numbers<[1], [0], [0], [1], [0, 0, 1, 1], [], []>} : vector<8x256xbf16>, vector<256x128xbf16>, vector<8x128xf32> -> vector<8x128xf32>
    %c0_14 = arith.constant 0 : index
    %c0_15 = arith.constant 0 : index
    %35 = vector.load %arg6[%c0_14, %c0_15] : memref<1x128xf32, #tpu.memory_space<vmem>>, vector<1x128xf32>
    %36 = vector.broadcast %35 : vector<1x128xf32> to vector<8x128xf32>
    %37 = arith.addf %34, %36 : vector<8x128xf32>
    %c0_16 = arith.constant 0 : index
    %c0_17 = arith.constant 0 : index
    %38 = vector.load %arg7[%c0_16, %c0_17] : memref<8x128xf32, #tpu.memory_space<vmem>>, vector<8x128xf32>
    tpu.vector_store %arg7[%c0_16, %c0_17], %37 {strides = array<i32>} : memref<8x128xf32, #tpu.memory_space<vmem>>, vector<8x128xf32>,
    return
  }
  func.func @transform_0(%arg0: i32) -> (i32, i32, i32) {
    %c0_i32 = arith.constant 0 : i32
    %c0_i32_0 = arith.constant 0 : i32
    %c0_i32_1 = arith.constant 0 : i32
    return %arg0, %c0_i32, %c0_i32_0 : i32, i32, i32
  }
  func.func @transform_1(%arg0: i32) -> (i32, i32) {
    %c0_i32 = arith.constant 0 : i32
    %c0_i32_0 = arith.constant 0 : i32
    %c0_i32_1 = arith.constant 0 : i32
    return %c0_i32, %c0_i32_0 : i32, i32
  }
  func.func @transform_2(%arg0: i32) -> (i32, i32) {
    %c0_i32 = arith.constant 0 : i32
    %c0_i32_0 = arith.constant 0 : i32
    %c0_i32_1 = arith.constant 0 : i32
    return %c0_i32, %c0_i32_0 : i32, i32
  }
  func.func @transform_3(%arg0: i32) -> (i32, i32) {
    %c0_i32 = arith.constant 0 : i32
    %c0_i32_0 = arith.constant 0 : i32
    %c0_i32_1 = arith.constant 0 : i32
    return %c0_i32, %c0_i32_0 : i32, i32
  }
  func.func @transform_4(%arg0: i32) -> (i32, i32) {
    %c0_i32 = arith.constant 0 : i32
    %c0_i32_0 = arith.constant 0 : i32
    %c0_i32_1 = arith.constant 0 : i32
    return %c0_i32, %c0_i32_0 : i32, i32
  }
  func.func @transform_5(%arg0: i32) -> (i32, i32) {
    %c0_i32 = arith.constant 0 : i32
    %c0_i32_0 = arith.constant 0 : i32
    %c0_i32_1 = arith.constant 0 : i32
    return %c0_i32, %c0_i32_0 : i32, i32
  }
  func.func @transform_6(%arg0: i32) -> (i32, i32) {
    %c0_i32 = arith.constant 0 : i32
    %c0_i32_0 = arith.constant 0 : i32
    return %arg0, %c0_i32 : i32, i32
  }
}

</mosaic_0001>

<llo_original>
// kernel: cnn_forward.1
$region0: #{cnn_forward.1}
  #allocation0 [shape = 'u32[]', space=smem, size = 0x4, offset = 0x4, fixed_abs, tag = 'smem constant byte address 0x4 - core index']
  #allocation1 [shape = 'u32[144,128]{1,0:T(1,128)}', space=vmem, size = 0x12000, scoped, tag = 'internal scratch']
  %s0 = inlined_call_operand.vmem [shape: bf16[8,16,32], index: 0, kind: input, shape index: {}]
  %s1 = inlined_call_operand.vmem [shape: bf16[32,1024], index: 1, kind: input, shape index: {}]
  %s2 = inlined_call_operand.vmem [shape: s32[1,256], index: 2, kind: input, shape index: {}]
  %s3 = inlined_call_operand.vmem [shape: f32[1,256], index: 3, kind: input, shape index: {}]
  %s4 = inlined_call_operand.vmem [shape: bf16[256,128], index: 4, kind: input, shape index: {}]
  %s5 = inlined_call_operand.vmem [shape: f32[1,128], index: 5, kind: input, shape index: {}]
  %s6 = inlined_call_operand.vmem [shape: f32[8,128], index: 6, kind: output, shape index: {}]
  %s7 = sld [smem:[#allocation0]]
  $region34: #{cnn_forward.1} parent=0
    _
  %s9 = ssub.s32 1, %s7
  %s10 = scalar_select 0, %s9, %s7
  // Predicated region
  $region2: #{cnn_forward.1} parent=0 // pred_check
    _
  $region3: #{cnn_forward.1} parent=0 // pred_check_branch
    %12 = sbr.rel (0) target = $region5
  $region4: #{cnn_forward.1} parent=0 // pred_region
    _
  $region5: #{cnn_forward.1} parent=0 // pred_fallthru
    _
  // Predicated region
  $region6: #{cnn_forward.1} parent=0 // pred_check
    _
  $region7: #{cnn_forward.1} parent=0 // pred_check_branch
    %14 = sbr.rel (0) target = $region9
  $region8: #{cnn_forward.1} parent=0 // pred_region
    _
  $region9: #{cnn_forward.1} parent=0 // pred_fallthru
    _
  // Predicated region
  $region10: #{cnn_forward.1} parent=0 // pred_check
    _
  $region11: #{cnn_forward.1} parent=0 // pred_check_branch
    %16 = sbr.rel (0) target = $region13
  $region12: #{cnn_forward.1} parent=0 // pred_region
    _
  $region13: #{cnn_forward.1} parent=0 // pred_fallthru
    _
  // Predicated region
  $region14: #{cnn_forward.1} parent=0 // pred_check
    _
  $region15: #{cnn_forward.1} parent=0 // pred_check_branch
    %18 = sbr.rel (0) target = $region17
  $region16: #{cnn_forward.1} parent=0 // pred_region
    _
  $region17: #{cnn_forward.1} parent=0 // pred_fallthru
    _
  // Predicated region
  $region18: #{cnn_forward.1} parent=0 // pred_check
    _
  $region19: #{cnn_forward.1} parent=0 // pred_check_branch
    %20 = sbr.rel (0) target = $region21
  $region20: #{cnn_forward.1} parent=0 // pred_region
    _
  $region21: #{cnn_forward.1} parent=0 // pred_fallthru
    _
  // Predicated region
  $region22: #{cnn_forward.1} parent=0 // pred_check
    _
  $region23: #{cnn_forward.1} parent=0 // pred_check_branch
    %22 = sbr.rel (0) target = $region25
  $region24: #{cnn_forward.1} parent=0 // pred_region
    _
  $region25: #{cnn_forward.1} parent=0 // pred_fallthru
    _
  %v24 = vld [vmem:[%s0] sm:$0xf]
  %v25 = vld [vmem:[%s0 + $0x4] sm:$0xf]
  %v26 = vld [vmem:[%s0 + $0x8] sm:$0xf]
  %v27 = vld [vmem:[%s0 + $0xc] sm:$0xf]
  %v28 = vld [vmem:[%s0 + $0x10] sm:$0xf]
  %v29 = vld [vmem:[%s0 + $0x14] sm:$0xf]
  %v30 = vld [vmem:[%s0 + $0x18] sm:$0xf]
  %v31 = vld [vmem:[%s0 + $0x1c] sm:$0xf]
  %v32 = vld [vmem:[%s0 + $0x20] sm:$0xf]
  %v33 = vld [vmem:[%s0 + $0x24] sm:$0xf]
  %v34 = vld [vmem:[%s0 + $0x28] sm:$0xf]
  %v35 = vld [vmem:[%s0 + $0x2c] sm:$0xf]
  %v36 = vld [vmem:[%s0 + $0x30] sm:$0xf]
  %v37 = vld [vmem:[%s0 + $0x34] sm:$0xf]
  %v38 = vld [vmem:[%s0 + $0x38] sm:$0xf]
  %v39 = vld [vmem:[%s0 + $0x3c] sm:$0xf]
  %v40 = vld [vmem:[%s1] sm:$0xff]
  %v41 = vld [vmem:[%s1 + $0x8] sm:$0xff]
  %v42 = vld [vmem:[%s1 + $0x10] sm:$0xff]
  %v43 = vld [vmem:[%s1 + $0x18] sm:$0xff]
  %v44 = vld [vmem:[%s1 + $0x20] sm:$0xff]
  %v45 = vld [vmem:[%s1 + $0x28] sm:$0xff]
  %v46 = vld [vmem:[%s1 + $0x30] sm:$0xff]
  %v47 = vld [vmem:[%s1 + $0x38] sm:$0xff]
  %v48 = vld [vmem:[%s1 + $0x40] sm:$0xff]
  %v49 = vld [vmem:[%s1 + $0x48] sm:$0xff]
  %v50 = vld [vmem:[%s1 + $0x50] sm:$0xff]
  %v51 = vld [vmem:[%s1 + $0x58] sm:$0xff]
  %v52 = vld [vmem:[%s1 + $0x60] sm:$0xff]
  %v53 = vld [vmem:[%s1 + $0x68] sm:$0xff]
  %v54 = vld [vmem:[%s1 + $0x70] sm:$0xff]
  %v55 = vld [vmem:[%s1 + $0x78] sm:$0xff]
  %v72 = vunpack.c.l.b16 %v24
  %v73 = vunpack.c.l.b16 %v25
  %v74 = vunpack.c.l.b16 %v26
  %v75 = vunpack.c.l.b16 %v27
  %v76 = vunpack.c.l.b16 %v28
  %v77 = vunpack.c.l.b16 %v29
  %v78 = vunpack.c.l.b16 %v30
  %v79 = vunpack.c.l.b16 %v31
  %v80 = vunpack.c.l.b16 %v32
  %v81 = vunpack.c.l.b16 %v33
  %v82 = vunpack.c.l.b16 %v34
  %v83 = vunpack.c.l.b16 %v35
  %v84 = vunpack.c.l.b16 %v36
  %v85 = vunpack.c.l.b16 %v37
  %v86 = vunpack.c.l.b16 %v38
  %v87 = vunpack.c.l.b16 %v39
  %v88 = vpack.c.b16 %v73, %v72
  %v89 = vpack.c.b16 %v75, %v74
  %v90 = vpack.c.b16 %v77, %v76
  %v91 = vpack.c.b16 %v79, %v78
  %v92 = vpack.c.b16 %v81, %v80
  %v93 = vpack.c.b16 %v83, %v82
  %v94 = vpack.c.b16 %v85, %v84
  %v95 = vpack.c.b16 %v87, %v86
  %v112 = vunpack.c.l.b16 %v40
  %v113 = vunpack.c.h.b16 %v40
  %v114 = vunpack.c.l.b16 %v41
  %v115 = vunpack.c.h.b16 %v41
  %v116 = vunpack.c.l.b16 %v42
  %v117 = vunpack.c.h.b16 %v42
  %v118 = vunpack.c.l.b16 %v43
  %v119 = vunpack.c.h.b16 %v43
  %v120 = vunpack.c.l.b16 %v44
  %v121 = vunpack.c.h.b16 %v44
  %v122 = vunpack.c.l.b16 %v45
  %v123 = vunpack.c.h.b16 %v45
  %v124 = vunpack.c.l.b16 %v46
  %v125 = vunpack.c.h.b16 %v46
  %v126 = vunpack.c.l.b16 %v47
  %v127 = vunpack.c.h.b16 %v47
  %v128 = vunpack.c.l.b16 %v48
  %v129 = vunpack.c.h.b16 %v48
  %v130 = vunpack.c.l.b16 %v49
  %v131 = vunpack.c.h.b16 %v49
  %v132 = vunpack.c.l.b16 %v50
  %v133 = vunpack.c.h.b16 %v50
  %v134 = vunpack.c.l.b16 %v51
  %v135 = vunpack.c.h.b16 %v51
  %v136 = vunpack.c.l.b16 %v52
  %v137 = vunpack.c.h.b16 %v52
  %v138 = vunpack.c.l.b16 %v53
  %v139 = vunpack.c.h.b16 %v53
  %v140 = vunpack.c.l.b16 %v54
  %v141 = vunpack.c.h.b16 %v54
  %v142 = vunpack.c.l.b16 %v55
  %v143 = vunpack.c.h.b16 %v55
  %v144 = vpack.c.b16 %v120, %v112
  %v145 = vpack.c.b16 %v121, %v113
  %v146 = vpack.c.b16 %v122, %v114
  %v147 = vpack.c.b16 %v123, %v115
  %v148 = vpack.c.b16 %v124, %v116
  %v149 = vpack.c.b16 %v125, %v117
  %v150 = vpack.c.b16 %v126, %v118
  %v151 = vpack.c.b16 %v127, %v119
  %v152 = vpack.c.b16 %v136, %v128
  %v153 = vpack.c.b16 %v137, %v129
  %v154 = vpack.c.b16 %v138, %v130
  %v155 = vpack.c.b16 %v139, %v131
  %v156 = vpack.c.b16 %v140, %v132
  %v157 = vpack.c.b16 %v141, %v133
  %v158 = vpack.c.b16 %v142, %v134
  %v159 = vpack.c.b16 %v143, %v135
  %vm176 = vcmask 261120
  %v178 = vsel %vm176, %v88, 0
  %v181 = vsel %vm176, %v89, 0
  %v184 = vsel %vm176, %v90, 0
  %v187 = vsel %vm176, %v91, 0
  %v190 = vsel %vm176, %v92, 0
  %v193 = vsel %vm176, %v93, 0
  %v196 = vsel %vm176, %v94, 0
  %v199 = vsel %vm176, %v95, 0
  %201 = vmatprep.subr.bf16.mxu0 %v145
  %202 = vmatpush1.bf16.msra.mxu0 %v144
  %203 = vmatprep.subr.bf16.mxu0 %v153
  %204 = vmatpush1.bf16.msra.mxu0 %v152
  %205 = vmatprep.subr.bf16.mxu0 0
  %206 = vmatpush1.bf16.msra.mxu0 0
  %207 = vmatprep.subr.bf16.mxu0 0
  %208 = vmatpush1.bf16.msra.mxu0 0
  %209 = vmatprep.subr.bf16.mxu0 0
  %210 = vmatpush1.bf16.msra.mxu0 0
  %211 = vmatprep.subr.bf16.mxu0 0
  %212 = vmatpush1.bf16.msra.mxu0 0
  %213 = vmatprep.subr.bf16.mxu0 0
  %214 = vmatpush1.bf16.msra.mxu0 0
  %215 = vmatprep.subr.bf16.mxu0 0
  %216 = vmatpush1.bf16.msra.mxu0 0
  %217 = vmatprep.subr.bf16.mxu0 0
  %218 = vmatpush1.bf16.msra.mxu0 0
  %219 = vmatprep.subr.bf16.mxu0 0
  %220 = vmatpush1.bf16.msra.mxu0 0
  %221 = vmatprep.subr.bf16.mxu0 0
  %222 = vmatpush1.bf16.msra.mxu0 0
  %223 = vmatprep.subr.bf16.mxu0 0
  %224 = vmatpush1.bf16.msra.mxu0 0
  %225 = vmatprep.subr.bf16.mxu0 0
  %226 = vmatpush1.bf16.msra.mxu0 0
  %227 = vmatprep.subr.bf16.mxu0 0
  %228 = vmatpush1.bf16.msra.mxu0 0
  %229 = vmatprep.subr.bf16.mxu0 0
  %230 = vmatpush1.bf16.msra.mxu0 0
  %231 = vmatprep.subr.bf16.mxu0 0
  %232 = vmatpush1.bf16.msra.mxu0 0
  %233 = vmatprep.mubr.bf16.mxu0 0
  %234 = vmatmul.mubr.bf16.gmra.mrb[0].mxu0 %v178
  %v235 = vpop.f32.mrb[0].mxu0
  %v236 = vadd.f32 0.0, %v235
  %v237 = vpop.f32.mrb[0].mxu0
  %v238 = vadd.f32 0.0, %v237
  %v239 = vpop.f32.mrb[0].mxu0
  %v240 = vadd.f32 0.0, %v239
  %v241 = vpop.f32.mrb[0].mxu0
  %v242 = vadd.f32 0.0, %v241
  %243 = vmatprep.mubr.bf16.mxu0 0
  %244 = vmatmul.mubr.bf16.gmra.mrb[0].mxu0 %v181
  %v245 = vpop.f32.mrb[0].mxu0
  %v246 = vadd.f32 0.0, %v245
  %v247 = vpop.f32.mrb[0].mxu0
  %v248 = vadd.f32 0.0, %v247
  %v249 = vpop.f32.mrb[0].mxu0
  %v250 = vadd.f32 0.0, %v249
  %v251 = vpop.f32.mrb[0].mxu0
  %v252 = vadd.f32 0.0, %v251
  %253 = vmatprep.mubr.bf16.mxu0 0
  %254 = vmatmul.mubr.bf16.gmra.mrb[0].mxu0 %v184
  %v255 = vpop.f32.mrb[0].mxu0
  %v256 = vadd.f32 0.0, %v255
  %v257 = vpop.f32.mrb[0].mxu0
  %v258 = vadd.f32 0.0, %v257
  %v259 = vpop.f32.mrb[0].mxu0
  %v260 = vadd.f32 0.0, %v259
  %v261 = vpop.f32.mrb[0].mxu0
  %v262 = vadd.f32 0.0, %v261
  %263 = vmatprep.mubr.bf16.mxu0 0
  %264 = vmatmul.mubr.bf16.gmra.mrb[0].mxu0 %v187
  %v265 = vpop.f32.mrb[0].mxu0
  %v266 = vadd.f32 0.0, %v265
  %v267 = vpop.f32.mrb[0].mxu0
  %v268 = vadd.f32 0.0, %v267
  %v269 = vpop.f32.mrb[0].mxu0
  %v270 = vadd.f32 0.0, %v269
  %v271 = vpop.f32.mrb[0].mxu0
  %v272 = vadd.f32 0.0, %v271
  %273 = vmatprep.mubr.bf16.mxu0 0
  %274 = vmatmul.mubr.bf16.gmra.mrb[0].mxu0 %v190
  %v275 = vpop.f32.mrb[0].mxu0
  %v276 = vadd.f32 0.0, %v275
  %v277 = vpop.f32.mrb[0].mxu0
  %v278 = vadd.f32 0.0, %v277
  %v279 = vpop.f32.mrb[0].mxu0
  %v280 = vadd.f32 0.0, %v279
  %v281 = vpop.f32.mrb[0].mxu0
  %v282 = vadd.f32 0.0, %v281
  %283 = vmatprep.mubr.bf16.mxu0 0
  %284 = vmatmul.mubr.bf16.gmra.mrb[0].mxu0 %v193
  %v285 = vpop.f32.mrb[0].mxu0
  %v286 = vadd.f32 0.0, %v285
  %v287 = vpop.f32.mrb[0].mxu0
  %v288 = vadd.f32 0.0, %v287
  %v289 = vpop.f32.mrb[0].mxu0
  %v290 = vadd.f32 0.0, %v289
  %v291 = vpop.f32.mrb[0].mxu0
  %v292 = vadd.f32 0.0, %v291
  %293 = vmatprep.mubr.bf16.mxu0 0
  %294 = vmatmul.mubr.bf16.gmra.mrb[0].mxu0 %v196
  %v295 = vpop.f32.mrb[0].mxu0
  %v296 = vadd.f32 0.0, %v295
  %v297 = vpop.f32.mrb[0].mxu0
  %v298 = vadd.f32 0.0, %v297
  %v299 = vpop.f32.mrb[0].mxu0
  %v300 = vadd.f32 0.0, %v299
  %v301 = vpop.f32.mrb[0].mxu0
  %v302 = vadd.f32 0.0, %v301
  %303 = vmatprep.mubr.bf16.mxu0 0
  %304 = vmatmul.mubr.bf16.gmra.mrb[0].mxu0 %v199
  %v305 = vpop.f32.mrb[0].mxu0
  %v306 = vadd.f32 0.0, %v305
  %v307 = vpop.f32.mrb[0].mxu0
  %v308 = vadd.f32 0.0, %v307
  %v309 = vpop.f32.mrb[0].mxu0
  %v310 = vadd.f32 0.0, %v309
  %v311 = vpop.f32.mrb[0].mxu0
  %v312 = vadd.f32 0.0, %v311
  %313 = vdwg.mxu0
  %314 = vmatprep.subr.bf16.mxu0 %v147
  %315 = vmatpush1.bf16.msra.mxu0 %v146
  %316 = vmatprep.subr.bf16.mxu0 %v155
  %317 = vmatpush1.bf16.msra.mxu0 %v154
  %318 = vmatprep.subr.bf16.mxu0 0
  %319 = vmatpush1.bf16.msra.mxu0 0
  %320 = vmatprep.subr.bf16.mxu0 0
  %321 = vmatpush1.bf16.msra.mxu0 0
  %322 = vmatprep.subr.bf16.mxu0 0
  %323 = vmatpush1.bf16.msra.mxu0 0
  %324 = vmatprep.subr.bf16.mxu0 0
  %325 = vmatpush1.bf16.msra.mxu0 0
  %326 = vmatprep.subr.bf16.mxu0 0
  %327 = vmatpush1.bf16.msra.mxu0 0
  %328 = vmatprep.subr.bf16.mxu0 0
  %329 = vmatpush1.bf16.msra.mxu0 0
  %330 = vmatprep.subr.bf16.mxu0 0
  %331 = vmatpush1.bf16.msra.mxu0 0
  %332 = vmatprep.subr.bf16.mxu0 0
  %333 = vmatpush1.bf16.msra.mxu0 0
  %334 = vmatprep.subr.bf16.mxu0 0
  %335 = vmatpush1.bf16.msra.mxu0 0
  %336 = vmatprep.subr.bf16.mxu0 0
  %337 = vmatpush1.bf16.msra.mxu0 0
  %338 = vmatprep.subr.bf16.mxu0 0
  %339 = vmatpush1.bf16.msra.mxu0 0
  %340 = vmatprep.subr.bf16.mxu0 0
  %341 = vmatpush1.bf16.msra.mxu0 0
  %342 = vmatprep.subr.bf16.mxu0 0
  %343 = vmatpush1.bf16.msra.mxu0 0
  %344 = vmatprep.subr.bf16.mxu0 0
  %345 = vmatpush1.bf16.msra.mxu0 0
  %346 = vmatprep.mubr.bf16.mxu0 0
  %347 = vmatmul.mubr.bf16.gmra.mrb[0].mxu0 %v178
  %v348 = vpop.f32.mrb[0].mxu0
  %v349 = vadd.f32 0.0, %v348
  %v350 = vpop.f32.mrb[0].mxu0
  %v351 = vadd.f32 0.0, %v350
  %v352 = vpop.f32.mrb[0].mxu0
  %v353 = vadd.f32 0.0, %v352
  %v354 = vpop.f32.mrb[0].mxu0
  %v355 = vadd.f32 0.0, %v354
  %356 = vmatprep.mubr.bf16.mxu0 0
  %357 = vmatmul.mubr.bf16.gmra.mrb[0].mxu0 %v181
  %v358 = vpop.f32.mrb[0].mxu0
  %v359 = vadd.f32 0.0, %v358
  %v360 = vpop.f32.mrb[0].mxu0
  %v361 = vadd.f32 0.0, %v360
  %v362 = vpop.f32.mrb[0].mxu0
  %v363 = vadd.f32 0.0, %v362
  %v364 = vpop.f32.mrb[0].mxu0
  %v365 = vadd.f32 0.0, %v364
  %366 = vmatprep.mubr.bf16.mxu0 0
  %367 = vmatmul.mubr.bf16.gmra.mrb[0].mxu0 %v184
  %v368 = vpop.f32.mrb[0].mxu0
  %v369 = vadd.f32 0.0, %v368
  %v370 = vpop.f32.mrb[0].mxu0
  %v371 = vadd.f32 0.0, %v370
  %v372 = vpop.f32.mrb[0].mxu0
  %v373 = vadd.f32 0.0, %v372
  %v374 = vpop.f32.mrb[0].mxu0
  %v375 = vadd.f32 0.0, %v374
  %376 = vmatprep.mubr.bf16.mxu0 0
  %377 = vmatmul.mubr.bf16.gmra.mrb[0].mxu0 %v187
  %v378 = vpop.f32.mrb[0].mxu0
  %v379 = vadd.f32 0.0, %v378
  %v380 = vpop.f32.mrb[0].mxu0
  %v381 = vadd.f32 0.0, %v380
  %v382 = vpop.f32.mrb[0].mxu0
  %v383 = vadd.f32 0.0, %v382
  %v384 = vpop.f32.mrb[0].mxu0
  %v385 = vadd.f32 0.0, %v384
  %386 = vmatprep.mubr.bf16.mxu0 0
  %387 = vmatmul.mubr.bf16.gmra.mrb[0].mxu0 %v190
  %v388 = vpop.f32.mrb[0].mxu0
  %v389 = vadd.f32 0.0, %v388
  %v390 = vpop.f32.mrb[0].mxu0
  %v391 = vadd.f32 0.0, %v390
  %v392 = vpop.f32.mrb[0].mxu0
  %v393 = vadd.f32 0.0, %v392
  %v394 = vpop.f32.mrb[0].mxu0
  %v395 = vadd.f32 0.0, %v394
  %396 = vmatprep.mubr.bf16.mxu0 0
  %397 = vmatmul.mubr.bf16.gmra.mrb[0].mxu0 %v193
  %v398 = vpop.f32.mrb[0].mxu0
  %v399 = vadd.f32 0.0, %v398
  %v400 = vpop.f32.mrb[0].mxu0
  %v401 = vadd.f32 0.0, %v400
  %v402 = vpop.f32.mrb[0].mxu0
  %v403 = vadd.f32 0.0, %v402
  %v404 = vpop.f32.mrb[0].mxu0
  %v405 = vadd.f32 0.0, %v404
  %406 = vmatprep.mubr.bf16.mxu0 0
  %407 = vmatmul.mubr.bf16.gmra.mrb[0].mxu0 %v196
  %v408 = vpop.f32.mrb[0].mxu0
  %v409 = vadd.f32 0.0, %v408
  %v410 = vpop.f32.mrb[0].mxu0
  %v411 = vadd.f32 0.0, %v410
  %v412 = vpop.f32.mrb[0].mxu0
  %v413 = vadd.f32 0.0, %v412
  %v414 = vpop.f32.mrb[0].mxu0
  %v415 = vadd.f32 0.0, %v414
  %416 = vmatprep.mubr.bf16.mxu0 0
  %417 = vmatmul.mubr.bf16.gmra.mrb[0].mxu0 %v199
  %v418 = vpop.f32.mrb[0].mxu0
  %v419 = vadd.f32 0.0, %v418
  %v420 = vpop.f32.mrb[0].mxu0
  %v421 = vadd.f32 0.0, %v420
  %v422 = vpop.f32.mrb[0].mxu0
  %v423 = vadd.f32 0.0, %v422
  %v424 = vpop.f32.mrb[0].mxu0
  %v425 = vadd.f32 0.0, %v424
  %426 = vdwg.mxu0
  %427 = vmatprep.subr.bf16.mxu0 %v149
  %428 = vmatpush1.bf16.msra.mxu0 %v148
  %429 = vmatprep.subr.bf16.mxu0 %v157
  %430 = vmatpush1.bf16.msra.mxu0 %v156
  %431 = vmatprep.subr.bf16.mxu0 0
  %432 = vmatpush1.bf16.msra.mxu0 0
  %433 = vmatprep.subr.bf16.mxu0 0
  %434 = vmatpush1.bf16.msra.mxu0 0
  %435 = vmatprep.subr.bf16.mxu0 0
  %436 = vmatpush1.bf16.msra.mxu0 0
  %437 = vmatprep.subr.bf16.mxu0 0
  %438 = vmatpush1.bf16.msra.mxu0 0
  %439 = vmatprep.subr.bf16.mxu0 0
  %440 = vmatpush1.bf16.msra.mxu0 0
  %441 = vmatprep.subr.bf16.mxu0 0
  %442 = vmatpush1.bf16.msra.mxu0 0
  %443 = vmatprep.subr.bf16.mxu0 0
  %444 = vmatpush1.bf16.msra.mxu0 0
  %445 = vmatprep.subr.bf16.mxu0 0
  %446 = vmatpush1.bf16.msra.mxu0 0
  %447 = vmatprep.subr.bf16.mxu0 0
  %448 = vmatpush1.bf16.msra.mxu0 0
  %449 = vmatprep.subr.bf16.mxu0 0
  %450 = vmatpush1.bf16.msra.mxu0 0
  %451 = vmatprep.subr.bf16.mxu0 0
  %452 = vmatpush1.bf16.msra.mxu0 0
  %453 = vmatprep.subr.bf16.mxu0 0
  %454 = vmatpush1.bf16.msra.mxu0 0
  %455 = vmatprep.subr.bf16.mxu0 0
  %456 = vmatpush1.bf16.msra.mxu0 0
  %457 = vmatprep.subr.bf16.mxu0 0
  %458 = vmatpush1.bf16.msra.mxu0 0
  %459 = vmatprep.mubr.bf16.mxu0 0
  %460 = vmatmul.mubr.bf16.gmra.mrb[0].mxu0 %v178
  %v461 = vpop.f32.mrb[0].mxu0
  %v462 = vadd.f32 0.0, %v461
  %v463 = vpop.f32.mrb[0].mxu0
  %v464 = vadd.f32 0.0, %v463
  %v465 = vpop.f32.mrb[0].mxu0
  %v466 = vadd.f32 0.0, %v465
  %v467 = vpop.f32.mrb[0].mxu0
  %v468 = vadd.f32 0.0, %v467
  %469 = vmatprep.mubr.bf16.mxu0 0
  %470 = vmatmul.mubr.bf16.gmra.mrb[0].mxu0 %v181
  %v471 = vpop.f32.mrb[0].mxu0
  %v472 = vadd.f32 0.0, %v471
  %v473 = vpop.f32.mrb[0].mxu0
  %v474 = vadd.f32 0.0, %v473
  %v475 = vpop.f32.mrb[0].mxu0
  %v476 = vadd.f32 0.0, %v475
  %v477 = vpop.f32.mrb[0].mxu0
  %v478 = vadd.f32 0.0, %v477
  %479 = vmatprep.mubr.bf16.mxu0 0
  %480 = vmatmul.mubr.bf16.gmra.mrb[0].mxu0 %v184
  %v481 = vpop.f32.mrb[0].mxu0
  %v482 = vadd.f32 0.0, %v481
  %v483 = vpop.f32.mrb[0].mxu0
  %v484 = vadd.f32 0.0, %v483
  %v485 = vpop.f32.mrb[0].mxu0
  %v486 = vadd.f32 0.0, %v485
  %v487 = vpop.f32.mrb[0].mxu0
  %v488 = vadd.f32 0.0, %v487
  %489 = vmatprep.mubr.bf16.mxu0 0
  %490 = vmatmul.mubr.bf16.gmra.mrb[0].mxu0 %v187
  %v491 = vpop.f32.mrb[0].mxu0
  %v492 = vadd.f32 0.0, %v491
  %v493 = vpop.f32.mrb[0].mxu0
  %v494 = vadd.f32 0.0, %v493
  %v495 = vpop.f32.mrb[0].mxu0
  %v496 = vadd.f32 0.0, %v495
  %v497 = vpop.f32.mrb[0].mxu0
  %v498 = vadd.f32 0.0, %v497
  %499 = vmatprep.mubr.bf16.mxu0 0
  %500 = vmatmul.mubr.bf16.gmra.mrb[0].mxu0 %v190
  %v501 = vpop.f32.mrb[0].mxu0
  %v502 = vadd.f32 0.0, %v501
  %v503 = vpop.f32.mrb[0].mxu0
  %v504 = vadd.f32 0.0, %v503
  %v505 = vpop.f32.mrb[0].mxu0
  %v506 = vadd.f32 0.0, %v505
  %v507 = vpop.f32.mrb[0].mxu0
  %v508 = vadd.f32 0.0, %v507
  %509 = vmatprep.mubr.bf16.mxu0 0
  %510 = vmatmul.mubr.bf16.gmra.mrb[0].mxu0 %v193
  %v511 = vpop.f32.mrb[0].mxu0
  %v512 = vadd.f32 0.0, %v511
  %v513 = vpop.f32.mrb[0].mxu0
  %v514 = vadd.f32 0.0, %v513
  %v515 = vpop.f32.mrb[0].mxu0
  %v516 = vadd.f32 0.0, %v515
  %v517 = vpop.f32.mrb[0].mxu0
  %v518 = vadd.f32 0.0, %v517
  %519 = vmatprep.mubr.bf16.mxu0 0
  %520 = vmatmul.mubr.bf16.gmra.mrb[0].mxu0 %v196
  %v521 = vpop.f32.mrb[0].mxu0
  %v522 = vadd.f32 0.0, %v521
  %v523 = vpop.f32.mrb[0].mxu0
  %v524 = vadd.f32 0.0, %v523
  %v525 = vpop.f32.mrb[0].mxu0
  %v526 = vadd.f32 0.0, %v525
  %v527 = vpop.f32.mrb[0].mxu0
  %v528 = vadd.f32 0.0, %v527
  %529 = vmatprep.mubr.bf16.mxu0 0
  %530 = vmatmul.mubr.bf16.gmra.mrb[0].mxu0 %v199
  %v531 = vpop.f32.mrb[0].mxu0
  %v532 = vadd.f32 0.0, %v531
  %v533 = vpop.f32.mrb[0].mxu0
  %v534 = vadd.f32 0.0, %v533
  %v535 = vpop.f32.mrb[0].mxu0
  %v536 = vadd.f32 0.0, %v535
  %v537 = vpop.f32.mrb[0].mxu0
  %v538 = vadd.f32 0.0, %v537
  %539 = vdwg.mxu0
  %540 = vmatprep.subr.bf16.mxu0 %v151
  %541 = vmatpush1.bf16.msra.mxu0 %v150
  %542 = vmatprep.subr.bf16.mxu0 %v159
  %543 = vmatpush1.bf16.msra.mxu0 %v158
  %544 = vmatprep.subr.bf16.mxu0 0
  %545 = vmatpush1.bf16.msra.mxu0 0
  %546 = vmatprep.subr.bf16.mxu0 0
  %547 = vmatpush1.bf16.msra.mxu0 0
  %548 = vmatprep.subr.bf16.mxu0 0
  %549 = vmatpush1.bf16.msra.mxu0 0
  %550 = vmatprep.subr.bf16.mxu0 0
  %551 = vmatpush1.bf16.msra.mxu0 0
  %552 = vmatprep.subr.bf16.mxu0 0
  %553 = vmatpush1.bf16.msra.mxu0 0
  %554 = vmatprep.subr.bf16.mxu0 0
  %555 = vmatpush1.bf16.msra.mxu0 0
  %556 = vmatprep.subr.bf16.mxu0 0
  %557 = vmatpush1.bf16.msra.mxu0 0
  %558 = vmatprep.subr.bf16.mxu0 0
  %559 = vmatpush1.bf16.msra.mxu0 0
  %560 = vmatprep.subr.bf16.mxu0 0
  %561 = vmatpush1.bf16.msra.mxu0 0
  %562 = vmatprep.subr.bf16.mxu0 0
  %563 = vmatpush1.bf16.msra.mxu0 0
  %564 = vmatprep.subr.bf16.mxu0 0
  %565 = vmatpush1.bf16.msra.mxu0 0
  %566 = vmatprep.subr.bf16.mxu0 0
  %567 = vmatpush1.bf16.msra.mxu0 0
  %568 = vmatprep.subr.bf16.mxu0 0
  %569 = vmatpush1.bf16.msra.mxu0 0
  %570 = vmatprep.subr.bf16.mxu0 0
  %571 = vmatpush1.bf16.msra.mxu0 0
  %572 = vmatprep.mubr.bf16.mxu0 0
  %573 = vmatmul.mubr.bf16.gmra.mrb[0].mxu0 %v178
  %v574 = vpop.f32.mrb[0].mxu0
  %v575 = vadd.f32 0.0, %v574
  %v576 = vpop.f32.mrb[0].mxu0
  %v577 = vadd.f32 0.0, %v576
  %v578 = vpop.f32.mrb[0].mxu0
  %v579 = vadd.f32 0.0, %v578
  %v580 = vpop.f32.mrb[0].mxu0
  %v581 = vadd.f32 0.0, %v580
  %582 = vmatprep.mubr.bf16.mxu0 0
  %583 = vmatmul.mubr.bf16.gmra.mrb[0].mxu0 %v181
  %v584 = vpop.f32.mrb[0].mxu0
  %v585 = vadd.f32 0.0, %v584
  %v586 = vpop.f32.mrb[0].mxu0
  %v587 = vadd.f32 0.0, %v586
  %v588 = vpop.f32.mrb[0].mxu0
  %v589 = vadd.f32 0.0, %v588
  %v590 = vpop.f32.mrb[0].mxu0
  %v591 = vadd.f32 0.0, %v590
  %592 = vmatprep.mubr.bf16.mxu0 0
  %593 = vmatmul.mubr.bf16.gmra.mrb[0].mxu0 %v184
  %v594 = vpop.f32.mrb[0].mxu0
  %v595 = vadd.f32 0.0, %v594
  %v596 = vpop.f32.mrb[0].mxu0
  %v597 = vadd.f32 0.0, %v596
  %v598 = vpop.f32.mrb[0].mxu0
  %v599 = vadd.f32 0.0, %v598
  %v600 = vpop.f32.mrb[0].mxu0
  %v601 = vadd.f32 0.0, %v600
  %602 = vmatprep.mubr.bf16.mxu0 0
  %603 = vmatmul.mubr.bf16.gmra.mrb[0].mxu0 %v187
  %v604 = vpop.f32.mrb[0].mxu0
  %v605 = vadd.f32 0.0, %v604
  %v606 = vpop.f32.mrb[0].mxu0
  %v607 = vadd.f32 0.0, %v606
  %v608 = vpop.f32.mrb[0].mxu0
  %v609 = vadd.f32 0.0, %v608
  %v610 = vpop.f32.mrb[0].mxu0
  %v611 = vadd.f32 0.0, %v610
  %612 = vmatprep.mubr.bf16.mxu0 0
  %613 = vmatmul.mubr.bf16.gmra.mrb[0].mxu0 %v190
  %v614 = vpop.f32.mrb[0].mxu0
  %v615 = vadd.f32 0.0, %v614
  %v616 = vpop.f32.mrb[0].mxu0
  %v617 = vadd.f32 0.0, %v616
  %v618 = vpop.f32.mrb[0].mxu0
  %v619 = vadd.f32 0.0, %v618
  %v620 = vpop.f32.mrb[0].mxu0
  %v621 = vadd.f32 0.0, %v620
  %622 = vmatprep.mubr.bf16.mxu0 0
  %623 = vmatmul.mubr.bf16.gmra.mrb[0].mxu0 %v193
  %v624 = vpop.f32.mrb[0].mxu0
  %v625 = vadd.f32 0.0, %v624
  %v626 = vpop.f32.mrb[0].mxu0
  %v627 = vadd.f32 0.0, %v626
  %v628 = vpop.f32.mrb[0].mxu0
  %v629 = vadd.f32 0.0, %v628
  %v630 = vpop.f32.mrb[0].mxu0
  %v631 = vadd.f32 0.0, %v630
  %632 = vmatprep.mubr.bf16.mxu0 0
  %633 = vmatmul.mubr.bf16.gmra.mrb[0].mxu0 %v196
  %v634 = vpop.f32.mrb[0].mxu0
  %v635 = vadd.f32 0.0, %v634
  %v636 = vpop.f32.mrb[0].mxu0
  %v637 = vadd.f32 0.0, %v636
  %v638 = vpop.f32.mrb[0].mxu0
  %v639 = vadd.f32 0.0, %v638
  %v640 = vpop.f32.mrb[0].mxu0
  %v641 = vadd.f32 0.0, %v640
  %642 = vmatprep.mubr.bf16.mxu0 0
  %643 = vmatmul.mubr.bf16.gmra.mrb[0].mxu0 %v199
  %v644 = vpop.f32.mrb[0].mxu0
  %v645 = vadd.f32 0.0, %v644
  %v646 = vpop.f32.mrb[0].mxu0
  %v647 = vadd.f32 0.0, %v646
  %v648 = vpop.f32.mrb[0].mxu0
  %v649 = vadd.f32 0.0, %v648
  %v650 = vpop.f32.mrb[0].mxu0
  %v651 = vadd.f32 0.0, %v650
  %652 = vdwg.mxu0
  %v653 = vrot.slane %v349, 1
  %v654 = vrot.slane %v351, 1
  %v655 = vrot.slane %v353, 1
  %v656 = vrot.slane %v355, 1
  %v657 = vrot.slane %v359, 1
  %v658 = vrot.slane %v361, 1
  %v659 = vrot.slane %v363, 1
  %v660 = vrot.slane %v365, 1
  %v661 = vrot.slane %v369, 1
  %v662 = vrot.slane %v371, 1
  %v663 = vrot.slane %v373, 1
  %v664 = vrot.slane %v375, 1
  %v665 = vrot.slane %v379, 1
  %v666 = vrot.slane %v381, 1
  %v667 = vrot.slane %v383, 1
  %v668 = vrot.slane %v385, 1
  %v669 = vrot.slane %v389, 1
  %v670 = vrot.slane %v391, 1
  %v671 = vrot.slane %v393, 1
  %v672 = vrot.slane %v395, 1
  %v673 = vrot.slane %v399, 1
  %v674 = vrot.slane %v401, 1
  %v675 = vrot.slane %v403, 1
  %v676 = vrot.slane %v405, 1
  %v677 = vrot.slane %v409, 1
  %v678 = vrot.slane %v411, 1
  %v679 = vrot.slane %v413, 1
  %v680 = vrot.slane %v415, 1
  %v681 = vrot.slane %v419, 1
  %v682 = vrot.slane %v421, 1
  %v683 = vrot.slane %v423, 1
  %v684 = vrot.slane %v425, 1
  %v685 = vlaneseq
  %v686 = vshrl.u32 %v685, 7
  %vm687 = vcmp.lt.s32.totalorder %v686, 7
  %v688 = vsel %vm687, %v681, %v683
  %v689 = vsel %vm687, %v682, %v684
  %v690 = vsel %vm687, %v679, %v681
  %v691 = vsel %vm687, %v680, %v682
  %v692 = vsel %vm687, %v677, %v679
  %v693 = vsel %vm687, %v678, %v680
  %v694 = vsel %vm687, %v675, %v677
  %v695 = vsel %vm687, %v676, %v678
  %v696 = vsel %vm687, %v673, %v675
  %v697 = vsel %vm687, %v674, %v676
  %v698 = vsel %vm687, %v671, %v673
  %v699 = vsel %vm687, %v672, %v674
  %v700 = vsel %vm687, %v669, %v671
  %v701 = vsel %vm687, %v670, %v672
  %v702 = vsel %vm687, %v667, %v669
  %v703 = vsel %vm687, %v668, %v670
  %v704 = vsel %vm687, %v665, %v667
  %v705 = vsel %vm687, %v666, %v668
  %v706 = vsel %vm687, %v663, %v665
  %v707 = vsel %vm687, %v664, %v666
  %v708 = vsel %vm687, %v661, %v663
  %v709 = vsel %vm687, %v662, %v664
  %v710 = vsel %vm687, %v659, %v661
  %v711 = vsel %vm687, %v660, %v662
  %v712 = vsel %vm687, %v657, %v659
  %v713 = vsel %vm687, %v658, %v660
  %v714 = vsel %vm687, %v655, %v657
  %v715 = vsel %vm687, %v656, %v658
  %v716 = vsel %vm687, %v653, %v655
  %v717 = vsel %vm687, %v654, %v656
  %v718 = vsel %vm687, %v683, %v653
  %v719 = vsel %vm687, %v684, %v654
  %v720 = vadd.f32 %v236, %v716
  %v721 = vadd.f32 %v238, %v717
  %v722 = vadd.f32 %v240, %v714
  %v723 = vadd.f32 %v242, %v715
  %v724 = vadd.f32 %v246, %v712
  %v725 = vadd.f32 %v248, %v713
  %v726 = vadd.f32 %v250, %v710
  %v727 = vadd.f32 %v252, %v711
  %v728 = vadd.f32 %v256, %v708
  %v729 = vadd.f32 %v258, %v709
  %v730 = vadd.f32 %v260, %v706
  %v731 = vadd.f32 %v262, %v707
  %v732 = vadd.f32 %v266, %v704
  %v733 = vadd.f32 %v268, %v705
  %v734 = vadd.f32 %v270, %v702
  %v735 = vadd.f32 %v272, %v703
  %v736 = vadd.f32 %v276, %v700
  %v737 = vadd.f32 %v278, %v701
  %v738 = vadd.f32 %v280, %v698
  %v739 = vadd.f32 %v282, %v699
  %v740 = vadd.f32 %v286, %v696
  %v741 = vadd.f32 %v288, %v697
  %v742 = vadd.f32 %v290, %v694
  %v743 = vadd.f32 %v292, %v695
  %v744 = vadd.f32 %v296, %v692
  %v745 = vadd.f32 %v298, %v693
  %v746 = vadd.f32 %v300, %v690
  %v747 = vadd.f32 %v302, %v691
  %v748 = vadd.f32 %v306, %v688
  %v749 = vadd.f32 %v308, %v689
  %v750 = vadd.f32 %v310, %v718
  %v751 = vadd.f32 %v312, %v719
  %v752 = vrot.slane %v462, 2
  %v753 = vrot.slane %v464, 2
  %v754 = vrot.slane %v466, 2
  %v755 = vrot.slane %v468, 2
  %v756 = vrot.slane %v472, 2
  %v757 = vrot.slane %v474, 2
  %v758 = vrot.slane %v476, 2
  %v759 = vrot.slane %v478, 2
  %v760 = vrot.slane %v482, 2
  %v761 = vrot.slane %v484, 2
  %v762 = vrot.slane %v486, 2
  %v763 = vrot.slane %v488, 2
  %v764 = vrot.slane %v492, 2
  %v765 = vrot.slane %v494, 2
  %v766 = vrot.slane %v496, 2
  %v767 = vrot.slane %v498, 2
  %v768 = vrot.slane %v502, 2
  %v769 = vrot.slane %v504, 2
  %v770 = vrot.slane %v506, 2
  %v771 = vrot.slane %v508, 2
  %v772 = vrot.slane %v512, 2
  %v773 = vrot.slane %v514, 2
  %v774 = vrot.slane %v516, 2
  %v775 = vrot.slane %v518, 2
  %v776 = vrot.slane %v522, 2
  %v777 = vrot.slane %v524, 2
  %v778 = vrot.slane %v526, 2
  %v779 = vrot.slane %v528, 2
  %v780 = vrot.slane %v532, 2
  %v781 = vrot.slane %v534, 2
  %v782 = vrot.slane %v536, 2
  %v783 = vrot.slane %v538, 2
  %vm784 = vcmp.lt.s32.totalorder %v686, 6
  %v785 = vsel %vm784, %v780, %v782
  %v786 = vsel %vm784, %v781, %v783
  %v787 = vsel %vm784, %v778, %v780
  %v788 = vsel %vm784, %v779, %v781
  %v789 = vsel %vm784, %v776, %v778
  %v790 = vsel %vm784, %v777, %v779
  %v791 = vsel %vm784, %v774, %v776
  %v792 = vsel %vm784, %v775, %v777
  %v793 = vsel %vm784, %v772, %v774
  %v794 = vsel %vm784, %v773, %v775
  %v795 = vsel %vm784, %v770, %v772
  %v796 = vsel %vm784, %v771, %v773
  %v797 = vsel %vm784, %v768, %v770
  %v798 = vsel %vm784, %v769, %v771
  %v799 = vsel %vm784, %v766, %v768
  %v800 = vsel %vm784, %v767, %v769
  %v801 = vsel %vm784, %v764, %v766
  %v802 = vsel %vm784, %v765, %v767
  %v803 = vsel %vm784, %v762, %v764
  %v804 = vsel %vm784, %v763, %v765
  %v805 = vsel %vm784, %v760, %v762
  %v806 = vsel %vm784, %v761, %v763
  %v807 = vsel %vm784, %v758, %v760
  %v808 = vsel %vm784, %v759, %v761
  %v809 = vsel %vm784, %v756, %v758
  %v810 = vsel %vm784, %v757, %v759
  %v811 = vsel %vm784, %v754, %v756
  %v812 = vsel %vm784, %v755, %v757
  %v813 = vsel %vm784, %v752, %v754
  %v814 = vsel %vm784, %v753, %v755
  %v815 = vsel %vm784, %v782, %v752
  %v816 = vsel %vm784, %v783, %v753
  %v817 = vadd.f32 %v720, %v813
  %v818 = vadd.f32 %v721, %v814
  %v819 = vadd.f32 %v722, %v811
  %v820 = vadd.f32 %v723, %v812
  %v821 = vadd.f32 %v724, %v809
  %v822 = vadd.f32 %v725, %v810
  %v823 = vadd.f32 %v726, %v807
  %v824 = vadd.f32 %v727, %v808
  %v825 = vadd.f32 %v728, %v805
  %v826 = vadd.f32 %v729, %v806
  %v827 = vadd.f32 %v730, %v803
  %v828 = vadd.f32 %v731, %v804
  %v829 = vadd.f32 %v732, %v801
  %v830 = vadd.f32 %v733, %v802
  %v831 = vadd.f32 %v734, %v799
  %v832 = vadd.f32 %v735, %v800
  %v833 = vadd.f32 %v736, %v797
  %v834 = vadd.f32 %v737, %v798
  %v835 = vadd.f32 %v738, %v795
  %v836 = vadd.f32 %v739, %v796
  %v837 = vadd.f32 %v740, %v793
  %v838 = vadd.f32 %v741, %v794
  %v839 = vadd.f32 %v742, %v791
  %v840 = vadd.f32 %v743, %v792
  %v841 = vadd.f32 %v744, %v789
  %v842 = vadd.f32 %v745, %v790
  %v843 = vadd.f32 %v746, %v787
  %v844 = vadd.f32 %v747, %v788
  %v845 = vadd.f32 %v748, %v785
  %v846 = vadd.f32 %v749, %v786
  %v847 = vadd.f32 %v750, %v815
  %v848 = vadd.f32 %v751, %v816
  %v849 = vrot.slane %v575, 3
  %v850 = vrot.slane %v577, 3
  %v851 = vrot.slane %v579, 3
  %v852 = vrot.slane %v581, 3
  %v853 = vrot.slane %v585, 3
  %v854 = vrot.slane %v587, 3
  %v855 = vrot.slane %v589, 3
  %v856 = vrot.slane %v591, 3
  %v857 = vrot.slane %v595, 3
  %v858 = vrot.slane %v597, 3
  %v859 = vrot.slane %v599, 3
  %v860 = vrot.slane %v601, 3
  %v861 = vrot.slane %v605, 3
  %v862 = vrot.slane %v607, 3
  %v863 = vrot.slane %v609, 3
  %v864 = vrot.slane %v611, 3
  %v865 = vrot.slane %v615, 3
  %v866 = vrot.slane %v617, 3
  %v867 = vrot.slane %v619, 3
  %v868 = vrot.slane %v621, 3
  %v869 = vrot.slane %v625, 3
  %v870 = vrot.slane %v627, 3
  %v871 = vrot.slane %v629, 3
  %v872 = vrot.slane %v631, 3
  %v873 = vrot.slane %v635, 3
  %v874 = vrot.slane %v637, 3
  %v875 = vrot.slane %v639, 3
  %v876 = vrot.slane %v641, 3
  %v877 = vrot.slane %v645, 3
  %v878 = vrot.slane %v647, 3
  %v879 = vrot.slane %v649, 3
  %v880 = vrot.slane %v651, 3
  %vm881 = vcmp.lt.s32.totalorder %v686, 5
  %v882 = vsel %vm881, %v877, %v879
  %v883 = vsel %vm881, %v878, %v880
  %v884 = vsel %vm881, %v875, %v877
  %v885 = vsel %vm881, %v876, %v878
  %v886 = vsel %vm881, %v873, %v875
  %v887 = vsel %vm881, %v874, %v876
  %v888 = vsel %vm881, %v871, %v873
  %v889 = vsel %vm881, %v872, %v874
  %v890 = vsel %vm881, %v869, %v871
  %v891 = vsel %vm881, %v870, %v872
  %v892 = vsel %vm881, %v867, %v869
  %v893 = vsel %vm881, %v868, %v870
  %v894 = vsel %vm881, %v865, %v867
  %v895 = vsel %vm881, %v866, %v868
  %v896 = vsel %vm881, %v863, %v865
  %v897 = vsel %vm881, %v864, %v866
  %v898 = vsel %vm881, %v861, %v863
  %v899 = vsel %vm881, %v862, %v864
  %v900 = vsel %vm881, %v859, %v861
  %v901 = vsel %vm881, %v860, %v862
  %v902 = vsel %vm881, %v857, %v859
  %v903 = vsel %vm881, %v858, %v860
  %v904 = vsel %vm881, %v855, %v857
  %v905 = vsel %vm881, %v856, %v858
  %v906 = vsel %vm881, %v853, %v855
  %v907 = vsel %vm881, %v854, %v856
  %v908 = vsel %vm881, %v851, %v853
  %v909 = vsel %vm881, %v852, %v854
  %v910 = vsel %vm881, %v849, %v851
  %v911 = vsel %vm881, %v850, %v852
  %v912 = vsel %vm881, %v879, %v849
  %v913 = vsel %vm881, %v880, %v850
  %v914 = vadd.f32 %v817, %v910
  %v915 = vadd.f32 %v818, %v911
  %v916 = vadd.f32 %v819, %v908
  %v917 = vadd.f32 %v820, %v909
  %v918 = vadd.f32 %v821, %v906
  %v919 = vadd.f32 %v822, %v907
  %v920 = vadd.f32 %v823, %v904
  %v921 = vadd.f32 %v824, %v905
  %v922 = vadd.f32 %v825, %v902
  %v923 = vadd.f32 %v826, %v903
  %v924 = vadd.f32 %v827, %v900
  %v925 = vadd.f32 %v828, %v901
  %v926 = vadd.f32 %v829, %v898
  %v927 = vadd.f32 %v830, %v899
  %v928 = vadd.f32 %v831, %v896
  %v929 = vadd.f32 %v832, %v897
  %v930 = vadd.f32 %v833, %v894
  %v931 = vadd.f32 %v834, %v895
  %v932 = vadd.f32 %v835, %v892
  %v933 = vadd.f32 %v836, %v893
  %v934 = vadd.f32 %v837, %v890
  %v935 = vadd.f32 %v838, %v891
  %v936 = vadd.f32 %v839, %v888
  %v937 = vadd.f32 %v840, %v889
  %v938 = vadd.f32 %v841, %v886
  %v939 = vadd.f32 %v842, %v887
  %v940 = vadd.f32 %v843, %v884
  %v941 = vadd.f32 %v844, %v885
  %v942 = vadd.f32 %v845, %v882
  %v943 = vadd.f32 %v846, %v883
  %v944 = vadd.f32 %v847, %v912
  %v945 = vadd.f32 %v848, %v913
  %v946 = vadd.s32 %v686, 8
  %v947 = vld [vmem:[%s2] sm:$0x3]
  %v948 = vsub.s32 17, %v947
  %v949 = vlaneseq
  %v950 = vshrl.u32 %v949, 7
  %v951 = vsub.s32 0, %v950
  %v952 = vrot.slane %v948, %v951
  %v953 = vlaneseq
  %v954 = vshrl.u32 %v953, 7
  %v955 = vsub.s32 1, %v954
  %v956 = vrot.slane %v948, %v955
  %vm957 = vcmp.lt.s32.totalorder %v686, %v952
  %vm958 = vcmp.lt.s32.totalorder %v686, %v956
  %vm959 = vcmp.lt.s32.totalorder %v946, %v952
  %vm960 = vcmp.lt.s32.totalorder %v946, %v956
  %v961 = vsel %vm957, 1, 0
  %v962 = vsel %vm958, 1, 0
  %v963 = vsel %vm959, 1, 0
  %v964 = vsel %vm960, 1, 0
  %vm965 = vcmp.eq.s32.totalorder %v961, 1
  %vm966 = vcmp.eq.s32.totalorder %v962, 1
  %vm967 = vcmp.eq.s32.totalorder %v963, 1
  %vm968 = vcmp.eq.s32.totalorder %v964, 1
  %v969 = vsel %vm965, %v914, -inf
  %v970 = vsel %vm966, %v915, -inf
  %v971 = vsel %vm967, %v916, -inf
  %v972 = vsel %vm968, %v917, -inf
  %v973 = vsel %vm965, %v918, -inf
  %v974 = vsel %vm966, %v919, -inf
  %v975 = vsel %vm967, %v920, -inf
  %v976 = vsel %vm968, %v921, -inf
  %v977 = vsel %vm965, %v922, -inf
  %v978 = vsel %vm966, %v923, -inf
  %v979 = vsel %vm967, %v924, -inf
  %v980 = vsel %vm968, %v925, -inf
  %v981 = vsel %vm965, %v926, -inf
  %v982 = vsel %vm966, %v927, -inf
  %v983 = vsel %vm967, %v928, -inf
  %v984 = vsel %vm968, %v929, -inf
  %v985 = vsel %vm965, %v930, -inf
  %v986 = vsel %vm966, %v931, -inf
  %v987 = vsel %vm967, %v932, -inf
  %v988 = vsel %vm968, %v933, -inf
  %v989 = vsel %vm965, %v934, -inf
  %v990 = vsel %vm966, %v935, -inf
  %v991 = vsel %vm967, %v936, -inf
  %v992 = vsel %vm968, %v937, -inf
  %v993 = vsel %vm965, %v938, -inf
  %v994 = vsel %vm966, %v939, -inf
  %v995 = vsel %vm967, %v940, -inf
  %v996 = vsel %vm968, %v941, -inf
  %v997 = vsel %vm965, %v942, -inf
  %v998 = vsel %vm966, %v943, -inf
  %v999 = vsel %vm967, %v944, -inf
  %v1000 = vsel %vm968, %v945, -inf
  %v1001 = vmax.f32 %v969, %v971
  %v1002 = vrot.slane %v1001, 4
  %v1003 = vmax.f32 %v1001, %v1002
  %v1004 = vrot.slane %v1003, 2
  %v1005 = vmax.f32 %v1003, %v1004
  %v1006 = vrot.slane %v1005, 1
  %v1007 = vmax.f32 %v1005, %v1006
  %v1008 = vmax.f32 %v970, %v972
  %v1009 = vrot.slane %v1008, 4
  %v1010 = vmax.f32 %v1008, %v1009
  %v1011 = vrot.slane %v1010, 2
  %v1012 = vmax.f32 %v1010, %v1011
  %v1013 = vrot.slane %v1012, 1
  %v1014 = vmax.f32 %v1012, %v1013
  %v1015 = vmax.f32 %v973, %v975
  %v1016 = vrot.slane %v1015, 4
  %v1017 = vmax.f32 %v1015, %v1016
  %v1018 = vrot.slane %v1017, 2
  %v1019 = vmax.f32 %v1017, %v1018
  %v1020 = vrot.slane %v1019, 1
  %v1021 = vmax.f32 %v1019, %v1020
  %v1022 = vmax.f32 %v974, %v976
  %v1023 = vrot.slane %v1022, 4
  %v1024 = vmax.f32 %v1022, %v1023
  %v1025 = vrot.slane %v1024, 2
  %v1026 = vmax.f32 %v1024, %v1025
  %v1027 = vrot.slane %v1026, 1
  %v1028 = vmax.f32 %v1026, %v1027
  %v1029 = vmax.f32 %v977, %v979
  %v1030 = vrot.slane %v1029, 4
  %v1031 = vmax.f32 %v1029, %v1030
  %v1032 = vrot.slane %v1031, 2
  %v1033 = vmax.f32 %v1031, %v1032
  %v1034 = vrot.slane %v1033, 1
  %v1035 = vmax.f32 %v1033, %v1034
  %v1036 = vmax.f32 %v978, %v980
  %v1037 = vrot.slane %v1036, 4
  %v1038 = vmax.f32 %v1036, %v1037
  %v1039 = vrot.slane %v1038, 2
  %v1040 = vmax.f32 %v1038, %v1039
  %v1041 = vrot.slane %v1040, 1
  %v1042 = vmax.f32 %v1040, %v1041
  %v1043 = vmax.f32 %v981, %v983
  %v1044 = vrot.slane %v1043, 4
  %v1045 = vmax.f32 %v1043, %v1044
  %v1046 = vrot.slane %v1045, 2
  %v1047 = vmax.f32 %v1045, %v1046
  %v1048 = vrot.slane %v1047, 1
  %v1049 = vmax.f32 %v1047, %v1048
  %v1050 = vmax.f32 %v982, %v984
  %v1051 = vrot.slane %v1050, 4
  %v1052 = vmax.f32 %v1050, %v1051
  %v1053 = vrot.slane %v1052, 2
  %v1054 = vmax.f32 %v1052, %v1053
  %v1055 = vrot.slane %v1054, 1
  %v1056 = vmax.f32 %v1054, %v1055
  %v1057 = vmax.f32 %v985, %v987
  %v1058 = vrot.slane %v1057, 4
  %v1059 = vmax.f32 %v1057, %v1058
  %v1060 = vrot.slane %v1059, 2
  %v1061 = vmax.f32 %v1059, %v1060
  %v1062 = vrot.slane %v1061, 1
  %v1063 = vmax.f32 %v1061, %v1062
  %v1064 = vmax.f32 %v986, %v988
  %v1065 = vrot.slane %v1064, 4
  %v1066 = vmax.f32 %v1064, %v1065
  %v1067 = vrot.slane %v1066, 2
  %v1068 = vmax.f32 %v1066, %v1067
  %v1069 = vrot.slane %v1068, 1
  %v1070 = vmax.f32 %v1068, %v1069
  %v1071 = vmax.f32 %v989, %v991
  %v1072 = vrot.slane %v1071, 4
  %v1073 = vmax.f32 %v1071, %v1072
  %v1074 = vrot.slane %v1073, 2
  %v1075 = vmax.f32 %v1073, %v1074
  %v1076 = vrot.slane %v1075, 1
  %v1077 = vmax.f32 %v1075, %v1076
  %v1078 = vmax.f32 %v990, %v992
  %v1079 = vrot.slane %v1078, 4
  %v1080 = vmax.f32 %v1078, %v1079
  %v1081 = vrot.slane %v1080, 2
  %v1082 = vmax.f32 %v1080, %v1081
  %v1083 = vrot.slane %v1082, 1
  %v1084 = vmax.f32 %v1082, %v1083
  %v1085 = vmax.f32 %v993, %v995
  %v1086 = vrot.slane %v1085, 4
  %v1087 = vmax.f32 %v1085, %v1086
  %v1088 = vrot.slane %v1087, 2
  %v1089 = vmax.f32 %v1087, %v1088
  %v1090 = vrot.slane %v1089, 1
  %v1091 = vmax.f32 %v1089, %v1090
  %v1092 = vmax.f32 %v994, %v996
  %v1093 = vrot.slane %v1092, 4
  %v1094 = vmax.f32 %v1092, %v1093
  %v1095 = vrot.slane %v1094, 2
  %v1096 = vmax.f32 %v1094, %v1095
  %v1097 = vrot.slane %v1096, 1
  %v1098 = vmax.f32 %v1096, %v1097
  %v1099 = vmax.f32 %v997, %v999
  %v1100 = vrot.slane %v1099, 4
  %v1101 = vmax.f32 %v1099, %v1100
  %v1102 = vrot.slane %v1101, 2
  %v1103 = vmax.f32 %v1101, %v1102
  %v1104 = vrot.slane %v1103, 1
  %v1105 = vmax.f32 %v1103, %v1104
  %v1106 = vmax.f32 %v998, %v1000
  %v1107 = vrot.slane %v1106, 4
  %v1108 = vmax.f32 %v1106, %v1107
  %v1109 = vrot.slane %v1108, 2
  %v1110 = vmax.f32 %v1108, %v1109
  %v1111 = vrot.slane %v1110, 1
  %v1112 = vmax.f32 %v1110, %v1111
  %v1113 = vld [vmem:[%s3] sm:$0x3]
  %v1115 = vlaneseq
  %v1116 = vshrl.u32 %v1115, 7
  %v1117 = vsub.s32 0, %v1116
  %v1118 = vrot.slane %v1113, %v1117
  %v1119 = vlaneseq
  %v1120 = vshrl.u32 %v1119, 7
  %v1121 = vsub.s32 1, %v1120
  %v1122 = vrot.slane %v1113, %v1121
  %v1125 = vadd.f32 %v1007, %v1118
  %v1126 = vadd.f32 %v1014, %v1122
  %v1127 = vadd.f32 %v1021, %v1118
  %v1128 = vadd.f32 %v1028, %v1122
  %v1129 = vadd.f32 %v1035, %v1118
  %v1130 = vadd.f32 %v1042, %v1122
  %v1131 = vadd.f32 %v1049, %v1118
  %v1132 = vadd.f32 %v1056, %v1122
  %v1133 = vadd.f32 %v1063, %v1118
  %v1134 = vadd.f32 %v1070, %v1122
  %v1135 = vadd.f32 %v1077, %v1118
  %v1136 = vadd.f32 %v1084, %v1122
  %v1137 = vadd.f32 %v1091, %v1118
  %v1138 = vadd.f32 %v1098, %v1122
  %v1139 = vadd.f32 %v1105, %v1118
  %v1140 = vadd.f32 %v1112, %v1122
  %v1141 = vmax.f32 %v1125, 0.0
  %v1142 = vmax.f32 %v1126, 0.0
  %v1143 = vmax.f32 %v1127, 0.0
  %v1144 = vmax.f32 %v1128, 0.0
  %v1145 = vmax.f32 %v1129, 0.0
  %v1146 = vmax.f32 %v1130, 0.0
  %v1147 = vmax.f32 %v1131, 0.0
  %v1148 = vmax.f32 %v1132, 0.0
  %v1149 = vmax.f32 %v1133, 0.0
  %v1150 = vmax.f32 %v1134, 0.0
  %v1151 = vmax.f32 %v1135, 0.0
  %v1152 = vmax.f32 %v1136, 0.0
  %v1153 = vmax.f32 %v1137, 0.0
  %v1154 = vmax.f32 %v1138, 0.0
  %v1155 = vmax.f32 %v1139, 0.0
  %v1156 = vmax.f32 %v1140, 0.0
  %v1157 = vpack.c.bf16 %v1141, %v1141
  %v1158 = vpack.c.bf16 %v1142, %v1142
  %v1159 = vpack.c.bf16 %v1143, %v1143
  %v1160 = vpack.c.bf16 %v1144, %v1144
  %v1161 = vpack.c.bf16 %v1145, %v1145
  %v1162 = vpack.c.bf16 %v1146, %v1146
  %v1163 = vpack.c.bf16 %v1147, %v1147
  %v1164 = vpack.c.bf16 %v1148, %v1148
  %v1165 = vpack.c.bf16 %v1149, %v1149
  %v1166 = vpack.c.bf16 %v1150, %v1150
  %v1167 = vpack.c.bf16 %v1151, %v1151
  %v1168 = vpack.c.bf16 %v1152, %v1152
  %v1169 = vpack.c.bf16 %v1153, %v1153
  %v1170 = vpack.c.bf16 %v1154, %v1154
  %v1171 = vpack.c.bf16 %v1155, %v1155
  %v1172 = vpack.c.bf16 %v1156, %v1156
  %v1173 = vld [vmem:[%s4] sm:$0xf]
  %v1174 = vld [vmem:[%s4 + $0x4] sm:$0xf]
  %v1175 = vld [vmem:[%s4 + $0x8] sm:$0xf]
  %v1176 = vld [vmem:[%s4 + $0xc] sm:$0xf]
  %v1177 = vld [vmem:[%s4 + $0x10] sm:$0xf]
  %v1178 = vld [vmem:[%s4 + $0x14] sm:$0xf]
  %v1179 = vld [vmem:[%s4 + $0x18] sm:$0xf]
  %v1180 = vld [vmem:[%s4 + $0x1c] sm:$0xf]
  %v1181 = vld [vmem:[%s4 + $0x20] sm:$0xf]
  %v1182 = vld [vmem:[%s4 + $0x24] sm:$0xf]
  %v1183 = vld [vmem:[%s4 + $0x28] sm:$0xf]
  %v1184 = vld [vmem:[%s4 + $0x2c] sm:$0xf]
  %v1185 = vld [vmem:[%s4 + $0x30] sm:$0xf]
  %v1186 = vld [vmem:[%s4 + $0x34] sm:$0xf]
  %v1187 = vld [vmem:[%s4 + $0x38] sm:$0xf]
  %v1188 = vld [vmem:[%s4 + $0x3c] sm:$0xf]
  %v1189 = vld [vmem:[%s4 + $0x40] sm:$0xf]
  %v1190 = vld [vmem:[%s4 + $0x44] sm:$0xf]
  %v1191 = vld [vmem:[%s4 + $0x48] sm:$0xf]
  %v1192 = vld [vmem:[%s4 + $0x4c] sm:$0xf]
  %v1193 = vld [vmem:[%s4 + $0x50] sm:$0xf]
  %v1194 = vld [vmem:[%s4 + $0x54] sm:$0xf]
  %v1195 = vld [vmem:[%s4 + $0x58] sm:$0xf]
  %v1196 = vld [vmem:[%s4 + $0x5c] sm:$0xf]
  %v1197 = vld [vmem:[%s4 + $0x60] sm:$0xf]
  %v1198 = vld [vmem:[%s4 + $0x64] sm:$0xf]
  %v1199 = vld [vmem:[%s4 + $0x68] sm:$0xf]
  %v1200 = vld [vmem:[%s4 + $0x6c] sm:$0xf]
  %v1201 = vld [vmem:[%s4 + $0x70] sm:$0xf]
  %v1202 = vld [vmem:[%s4 + $0x74] sm:$0xf]
  %v1203 = vld [vmem:[%s4 + $0x78] sm:$0xf]
  %v1204 = vld [vmem:[%s4 + $0x7c] sm:$0xf]
  %v1205 = vld [vmem:[%s5] sm:$0x1]
  %v1207 = vlaneseq
  %v1208 = vshrl.u32 %v1207, 7
  %v1209 = vsub.s32 0, %v1208
  %v1210 = vrot.slane %v1205, %v1209
  %v1228 = vunpack.c.l.b16 %v1157
  %v1229 = vunpack.c.l.b16 %v1158
  %v1230 = vunpack.c.l.b16 %v1159
  %v1231 = vunpack.c.l.b16 %v1160
  %v1232 = vunpack.c.l.b16 %v1161
  %v1233 = vunpack.c.l.b16 %v1162
  %v1234 = vunpack.c.l.b16 %v1163
  %v1235 = vunpack.c.l.b16 %v1164
  %v1236 = vunpack.c.l.b16 %v1165
  %v1237 = vunpack.c.l.b16 %v1166
  %v1238 = vunpack.c.l.b16 %v1167
  %v1239 = vunpack.c.l.b16 %v1168
  %v1240 = vunpack.c.l.b16 %v1169
  %v1241 = vunpack.c.l.b16 %v1170
  %v1242 = vunpack.c.l.b16 %v1171
  %v1243 = vunpack.c.l.b16 %v1172
  %v1244 = vrot.slane %v1230, 7
  %vm1245 = vcmask 1041409
  %v1246 = vsel %vm1245, %v1244, %v1228
  %v1247 = vrot.slane %v1232, 6
  %vm1248 = vcmask 1042434
  %v1249 = vsel %vm1248, %v1247, %v1246
  %v1250 = vrot.slane %v1234, 5
  %vm1251 = vcmask 1043459
  %v1252 = vsel %vm1251, %v1250, %v1249
  %v1253 = vrot.slane %v1236, 4
  %vm1254 = vcmask 1044484
  %v1255 = vsel %vm1254, %v1253, %v1252
  %v1256 = vrot.slane %v1238, 3
  %vm1257 = vcmask 1045509
  %v1258 = vsel %vm1257, %v1256, %v1255
  %v1259 = vrot.slane %v1240, 2
  %vm1260 = vcmask 1046534
  %v1261 = vsel %vm1260, %v1259, %v1258
  %v1262 = vrot.slane %v1242, 1
  %vm1263 = vcmask 1047559
  %v1264 = vsel %vm1263, %v1262, %v1261
  %v1265 = vrot.slane %v1231, 7
  %v1266 = vsel %vm1245, %v1265, %v1229
  %v1267 = vrot.slane %v1233, 6
  %v1268 = vsel %vm1248, %v1267, %v1266
  %v1269 = vrot.slane %v1235, 5
  %v1270 = vsel %vm1251, %v1269, %v1268
  %v1271 = vrot.slane %v1237, 4
  %v1272 = vsel %vm1254, %v1271, %v1270
  %v1273 = vrot.slane %v1239, 3
  %v1274 = vsel %vm1257, %v1273, %v1272
  %v1275 = vrot.slane %v1241, 2
  %v1276 = vsel %vm1260, %v1275, %v1274
  %v1277 = vrot.slane %v1243, 1
  %v1278 = vsel %vm1263, %v1277, %v1276
  %v1279 = vpack.c.b16 %v1264, %v1264
  %v1280 = vpack.c.b16 %v1278, %v1278
  %v1315 = vunpack.c.l.b16 %v1173
  %v1316 = vunpack.c.l.b16 %v1174
  %v1317 = vunpack.c.l.b16 %v1175
  %v1318 = vunpack.c.l.b16 %v1176
  %v1319 = vunpack.c.l.b16 %v1177
  %v1320 = vunpack.c.l.b16 %v1178
  %v1321 = vunpack.c.l.b16 %v1179
  %v1322 = vunpack.c.l.b16 %v1180
  %v1323 = vunpack.c.l.b16 %v1181
  %v1324 = vunpack.c.l.b16 %v1182
  %v1325 = vunpack.c.l.b16 %v1183
  %v1326 = vunpack.c.l.b16 %v1184
  %v1327 = vunpack.c.l.b16 %v1185
  %v1328 = vunpack.c.l.b16 %v1186
  %v1329 = vunpack.c.l.b16 %v1187
  %v1330 = vunpack.c.l.b16 %v1188
  %v1331 = vunpack.c.l.b16 %v1189
  %v1332 = vunpack.c.l.b16 %v1190
  %v1333 = vunpack.c.l.b16 %v1191
  %v1334 = vunpack.c.l.b16 %v1192
  %v1335 = vunpack.c.l.b16 %v1193
  %v1336 = vunpack.c.l.b16 %v1194
  %v1337 = vunpack.c.l.b16 %v1195
  %v1338 = vunpack.c.l.b16 %v1196
  %v1339 = vunpack.c.l.b16 %v1197
  %v1340 = vunpack.c.l.b16 %v1198
  %v1341 = vunpack.c.l.b16 %v1199
  %v1342 = vunpack.c.l.b16 %v1200
  %v1343 = vunpack.c.l.b16 %v1201
  %v1344 = vunpack.c.l.b16 %v1202
  %v1345 = vunpack.c.l.b16 %v1203
  %v1346 = vunpack.c.l.b16 %v1204
  %v1347 = vpack.c.b16 %v1316, %v1315
  %v1348 = vpack.c.b16 %v1318, %v1317
  %v1349 = vpack.c.b16 %v1320, %v1319
  %v1350 = vpack.c.b16 %v1322, %v1321
  %v1351 = vpack.c.b16 %v1324, %v1323
  %v1352 = vpack.c.b16 %v1326, %v1325
  %v1353 = vpack.c.b16 %v1328, %v1327
  %v1354 = vpack.c.b16 %v1330, %v1329
  %v1355 = vpack.c.b16 %v1332, %v1331
  %v1356 = vpack.c.b16 %v1334, %v1333
  %v1357 = vpack.c.b16 %v1336, %v1335
  %v1358 = vpack.c.b16 %v1338, %v1337
  %v1359 = vpack.c.b16 %v1340, %v1339
  %v1360 = vpack.c.b16 %v1342, %v1341
  %v1361 = vpack.c.b16 %v1344, %v1343
  %v1362 = vpack.c.b16 %v1346, %v1345
  %1379 = vmatprep.subr.bf16.mxu0 0
  %1380 = vmatpush1.bf16.msra.mxu0 %v1347
  %1381 = vmatprep.subr.bf16.mxu0 0
  %1382 = vmatpush1.bf16.msra.mxu0 %v1348
  %1383 = vmatprep.subr.bf16.mxu0 0
  %1384 = vmatpush1.bf16.msra.mxu0 %v1349
  %1385 = vmatprep.subr.bf16.mxu0 0
  %1386 = vmatpush1.bf16.msra.mxu0 %v1350
  %1387 = vmatprep.subr.bf16.mxu0 0
  %1388 = vmatpush1.bf16.msra.mxu0 %v1351
  %1389 = vmatprep.subr.bf16.mxu0 0
  %1390 = vmatpush1.bf16.msra.mxu0 %v1352
  %1391 = vmatprep.subr.bf16.mxu0 0
  %1392 = vmatpush1.bf16.msra.mxu0 %v1353
  %1393 = vmatprep.subr.bf16.mxu0 0
  %1394 = vmatpush1.bf16.msra.mxu0 %v1354
  %1395 = vmatprep.subr.bf16.mxu0 0
  %1396 = vmatpush1.bf16.msra.mxu0 %v1355
  %1397 = vmatprep.subr.bf16.mxu0 0
  %1398 = vmatpush1.bf16.msra.mxu0 %v1356
  %1399 = vmatprep.subr.bf16.mxu0 0
  %1400 = vmatpush1.bf16.msra.mxu0 %v1357
  %1401 = vmatprep.subr.bf16.mxu0 0
  %1402 = vmatpush1.bf16.msra.mxu0 %v1358
  %1403 = vmatprep.subr.bf16.mxu0 0
  %1404 = vmatpush1.bf16.msra.mxu0 %v1359
  %1405 = vmatprep.subr.bf16.mxu0 0
  %1406 = vmatpush1.bf16.msra.mxu0 %v1360
  %1407 = vmatprep.subr.bf16.mxu0 0
  %1408 = vmatpush1.bf16.msra.mxu0 %v1361
  %1409 = vmatprep.subr.bf16.mxu0 0
  %1410 = vmatpush1.bf16.msra.mxu0 %v1362
  %1411 = vmatprep.mubr.bf16.mxu0 %v1280
  %1412 = vmatmul.mubr.bf16.gmra.mrb[0].mxu0 %v1279
  %v1413 = vpop.f32.mrb[0].mxu0
  %v1414 = vadd.f32 %v1210, %v1413
  %v1415 = vpop.f32.mrb[0].mxu0
  %v1416 = vpop.f32.mrb[0].mxu0
  %v1417 = vpop.f32.mrb[0].mxu0
  %1418 = vdwg.mxu0
  %1419 = vst [vmem:[%s6] sm:$0xff] %v1414
  // Predicated region
  $region26: #{cnn_forward.1} parent=0 // pred_check
    _
  $region27: #{cnn_forward.1} parent=0 // pred_check_branch
    %1421 = sbr.rel (0) target = $region29
  $region28: #{cnn_forward.1} parent=0 // pred_region
    _
  $region29: #{cnn_forward.1} parent=0 // pred_fallthru
    _
  // Predicated region
  $region30: #{cnn_forward.1} parent=0 // pred_check
    _
  $region31: #{cnn_forward.1} parent=0 // pred_check_branch
    %1423 = sbr.rel (0) target = $region33
  $region32: #{cnn_forward.1} parent=0 // pred_region
    _
  $region33: #{cnn_forward.1} parent=0 // pred_fallthru
    _

</llo_original>
